<compile_context>
chip_gen: v5e
topology: v5e:2x2
jax: 0.10.0
libtpu: 0.0.40
codegen_flags: <defaults>
</compile_context>

<pallas_src>
import functools

import jax
import jax.numpy as jnp
from jax.experimental import pallas as pl
from jax.experimental.pallas import tpu as pltpu

LATENT_SHAPE = (8, 4, 4)          # (C, H, W)
M = 5                             # seq_len
FEAT = LATENT_SHAPE[0] * LATENT_SHAPE[1] * LATENT_SHAPE[2]   # 128 -> lane dim


def _relu_dot(lhs, w_bf16):
    """relu(lhs @ w) on the MXU: bf16 operands, f32 accumulation."""
    return jnp.maximum(
        jnp.dot(lhs.astype(jnp.bfloat16), w_bf16,
                preferred_element_type=jnp.float32),
        0.0)


def _encoder_train_kernel(x_ref, aug_ref, wsd0_ref, wm0_ref, wsd1_ref, wm1_ref,
                          sem_o, dyn_o, mrg_o, nce_o, *, inv_n):
    rp = x_ref.shape[0]
    f = FEAT

    x = x_ref[...]                                    # (Rp, F) f32
    aug = aug_ref[...]                                # (Rp, F) f32, no-grad stream

    # ---- layer 0: sem == dyn == mrg == x -> one 256-wide weight push --------
    sd0 = _relu_dot(x, wsd0_ref[...])                 # (Rp, 2F) = [sem0 | dyn0]
    sem0 = sd0[:, :f]
    dyn0 = sd0[:, f:]
    mrg0 = _relu_dot(sem0 + dyn0 + x, wm0_ref[...])   # (Rp, F)

    # ---- layer 1 (NCE layer): share the [ws1|wd1] push across sem/aug/dyn ---
    lhs1 = jnp.concatenate(
        [sem0.astype(jnp.bfloat16),
         aug.astype(jnp.bfloat16),
         dyn0.astype(jnp.bfloat16)], axis=0)          # (3Rp, F)
    out1 = _relu_dot(lhs1, wsd1_ref[...])             # (3Rp, 2F), one weight push
    sem1 = out1[:rp, :f]                              # sem0 @ ws1
    aug1 = out1[rp:2 * rp, :f]                        # aug  @ ws1 (shared RHS)
    dyn1 = out1[2 * rp:, f:]                          # dyn0 @ wd1
    mrg1 = _relu_dot(sem1 + dyn1 + mrg0, wm1_ref[...])

    # L2-contrast NCE, last layer only (reference overwrites nce each layer).
    # Padded rows are all-zero on both streams, so they contribute nothing.
    diff = sem1 - aug1
    nce_o[0] = jnp.sum(diff * diff) * jnp.float32(inv_n)

    sem_o[...] = sem1
    dyn_o[...] = dyn1
    mrg_o[...] = mrg1


def _encoder_eval_kernel(x_ref, wsd0_ref, wm0_ref, wsd1_ref, wm1_ref,
                         sem_o, dyn_o, mrg_o):
    rp = x_ref.shape[0]
    f = FEAT

    x = x_ref[...]                                    # (Rp, F) f32

    # ---- layer 0 -------------------------------------------------------------
    sd0 = _relu_dot(x, wsd0_ref[...])                 # (Rp, 2F) = [sem0 | dyn0]
    sem0 = sd0[:, :f]
    dyn0 = sd0[:, f:]
    mrg0 = _relu_dot(sem0 + dyn0 + x, wm0_ref[...])

    # ---- layer 1: no aug / NCE work in eval ----------------------------------
    lhs1 = jnp.concatenate(
        [sem0.astype(jnp.bfloat16), dyn0.astype(jnp.bfloat16)], axis=0)  # (2Rp, F)
    out1 = _relu_dot(lhs1, wsd1_ref[...])             # (2Rp, 2F), one weight push
    sem1 = out1[:rp, :f]                              # sem0 @ ws1
    dyn1 = out1[rp:, f:]                              # dyn0 @ wd1
    mrg1 = _relu_dot(sem1 + dyn1 + mrg0, wm1_ref[...])

    sem_o[...] = sem1
    dyn_o[...] = dyn1
    mrg_o[...] = mrg1


def init_encoder_params(key):
    """Per-layer f32 weights mirroring the module: 2 x (Ws, Wd, Wm), (FEAT,FEAT)."""
    params = []
    scale = 1.0 / jnp.sqrt(jnp.float32(FEAT))
    for i in range(2):
        k = jax.random.fold_in(key, i)
        ks, kd, km = jax.random.split(k, 3)
        params.append((
            jax.random.normal(ks, (FEAT, FEAT), jnp.float32) * scale,
            jax.random.normal(kd, (FEAT, FEAT), jnp.float32) * scale,
            jax.random.normal(km, (FEAT, FEAT), jnp.float32) * scale,
        ))
    return params


def pack_encoder_params(params):
    """Pack + cast once: per layer, [Ws | Wd] -> (128,256) bf16, Wm -> (128,128) bf16."""
    packed = {}
    for i, (ws, wd, wm) in enumerate(params):
        packed[f"wsd{i}"] = jnp.concatenate([ws, wd], axis=1).astype(jnp.bfloat16)
        packed[f"wm{i}"] = wm.astype(jnp.bfloat16)
    return packed


@functools.partial(jax.jit, static_argnames=("training",))
def encoder_forward(packed, x, training, x_aug=None):
    """Mirrors Encoder.forward: semantics = dynamics = merged = x (passed once),
    two EncLayers fused into a single pallas_call, nce taken from the last layer."""
    B = x.shape[0]
    R = B * M
    Rp = ((R + 7) // 8) * 8          # pad rows to a sublane multiple

    def flat_pad(t):
        t = t.reshape(R, FEAT).astype(jnp.float32)
        if Rp != R:
            t = jnp.pad(t, ((0, Rp - R), (0, 0)))
        return t

    x_flat = flat_pad(x)

    vmem = pl.BlockSpec(memory_space=pltpu.MemorySpace.VMEM)
    smem = pl.BlockSpec(memory_space=pltpu.MemorySpace.SMEM)
    act_shape = jax.ShapeDtypeStruct((Rp, FEAT), jnp.float32)

    if training:
        if x_aug is None:
            raise ValueError("x_aug is required when training=True")
        aug_flat = jax.lax.stop_gradient(flat_pad(x_aug))   # torch.no_grad()
        kernel = functools.partial(_encoder_train_kernel,
                                   inv_n=1.0 / float(R * FEAT))
        sem_p, dyn_p, mrg_p, nce_arr = pl.pallas_call(
            kernel,
            out_shape=[act_shape, act_shape, act_shape,
                       jax.ShapeDtypeStruct((1,), jnp.float32)],
            in_specs=[vmem] * 6,
            out_specs=[vmem, vmem, vmem, smem],
        )(x_flat, aug_flat,
          packed["wsd0"], packed["wm0"], packed["wsd1"], packed["wm1"])
        nce = nce_arr[0]
    else:
        sem_p, dyn_p, mrg_p = pl.pallas_call(
            _encoder_eval_kernel,
            out_shape=[act_shape, act_shape, act_shape],
            in_specs=[vmem] * 5,
            out_specs=[vmem, vmem, vmem],
        )(x_flat,
          packed["wsd0"], packed["wm0"], packed["wsd1"], packed["wm1"])
        nce = jnp.float32(0.0)

    out_shape = (B, M) + LATENT_SHAPE
    unflat = lambda t: t[:R].reshape(out_shape)
    return unflat(sem_p), unflat(dyn_p), unflat(mrg_p), nce


if __name__ == "__main__":
    key = jax.random.PRNGKey(0)
    k_p, k_x, k_a = jax.random.split(key, 3)

    params = init_encoder_params(k_p)
    packed = pack_encoder_params(params)

    B = 2
    x = jax.random.normal(k_x, (B, M) + LATENT_SHAPE, jnp.float32)      # (2,5,8,4,4)
    x_aug = jax.random.normal(k_a, (B, M) + LATENT_SHAPE, jnp.float32)  # (2,5,8,4,4)

    # Training path (aug stream + NCE from the last layer).
    semantics, dynamics, merged, nce = encoder_forward(
        packed, x, training=True, x_aug=x_aug)
    jax.block_until_ready((semantics, dynamics, merged, nce))

    # Eval path (no aug / NCE work at all).
    sem_e, dyn_e, mrg_e, nce_e = encoder_forward(packed, x, training=False)
    jax.block_until_ready((sem_e, dyn_e, mrg_e, nce_e))

    assert semantics.shape == (B, M) + LATENT_SHAPE
    assert dynamics.shape == (B, M) + LATENT_SHAPE
    assert merged.shape == (B, M) + LATENT_SHAPE
    assert nce.shape == ()
    assert sem_e.shape == (B, M) + LATENT_SHAPE
    assert dyn_e.shape == (B, M) + LATENT_SHAPE
    assert mrg_e.shape == (B, M) + LATENT_SHAPE
    assert nce_e.shape == ()
    print("KERNEL_OK")
</pallas_src>

<mosaic_0001>
module attributes {stable_mosaic.version = 11 : i64} {
  func.func @_encoder_train_kernel(%arg0: memref<16x128xf32, #tpu.memory_space<vmem>>, %arg1: memref<16x128xf32, #tpu.memory_space<vmem>>, %arg2: memref<128x256xbf16, #tpu.memory_space<vmem>>, %arg3: memref<128x128xbf16, #tpu.memory_space<vmem>>, %arg4: memref<128x256xbf16, #tpu.memory_space<vmem>>, %arg5: memref<128x128xbf16, #tpu.memory_space<vmem>>, %arg6: memref<16x128xf32, #tpu.memory_space<vmem>>, %arg7: memref<16x128xf32, #tpu.memory_space<vmem>>, %arg8: memref<16x128xf32, #tpu.memory_space<vmem>>, %arg9: memref<1xf32, #tpu.memory_space<smem>>) attributes {dimension_semantics = [], scalar_prefetch = 0 : i64, scratch_operands = 0 : i64, tpu.core_type = #tpu.core_type<tc>} {
    %c0 = arith.constant 0 : index
    %c0_0 = arith.constant 0 : index
    %0 = vector.load %arg0[%c0, %c0_0] : memref<16x128xf32, #tpu.memory_space<vmem>>, vector<16x128xf32>
    %c0_1 = arith.constant 0 : index
    %c0_2 = arith.constant 0 : index
    %1 = vector.load %arg1[%c0_1, %c0_2] : memref<16x128xf32, #tpu.memory_space<vmem>>, vector<16x128xf32>
    %c0_3 = arith.constant 0 : index
    %c0_4 = arith.constant 0 : index
    %2 = vector.load %arg2[%c0_3, %c0_4] : memref<128x256xbf16, #tpu.memory_space<vmem>>, vector<128x256xbf16>
    %3 = arith.truncf %0 : vector<16x128xf32> to vector<16x128xbf16>
    %cst = arith.constant dense<0.000000e+00> : vector<16x256xf32>
    %4 = tpu.matmul %3, %2, %cst {dimension_numbers = #tpu.dot_dimension_numbers<[1], [0], [0], [1], [0, 0, 1, 1], [], []>} : vector<16x128xbf16>, vector<128x256xbf16>, vector<16x256xf32> -> vector<16x256xf32>
    %cst_5 = arith.constant 0.000000e+00 : f32
    %5 = vector.broadcast %cst_5 : f32 to vector<16x256xf32>
    %6 = arith.maximumf %4, %5 : vector<16x256xf32>
    %7 = vector.extract_strided_slice %6 {offsets = [0, 0], sizes = [16, 128], strides = [1, 1]} : vector<16x256xf32> to vector<16x128xf32>
    %8 = vector.extract_strided_slice %6 {offsets = [0, 128], sizes = [16, 128], strides = [1, 1]} : vector<16x256xf32> to vector<16x128xf32>
    %9 = arith.addf %7, %8 : vector<16x128xf32>
    %10 = arith.addf %9, %0 : vector<16x128xf32>
    %c0_6 = arith.constant 0 : index
    %c0_7 = arith.constant 0 : index
    %11 = vector.load %arg3[%c0_6, %c0_7] : memref<128x128xbf16, #tpu.memory_space<vmem>>, vector<128x128xbf16>
    %12 = arith.truncf %10 : vector<16x128xf32> to vector<16x128xbf16>
    %cst_8 = arith.constant dense<0.000000e+00> : vector<16x128xf32>
    %13 = tpu.matmul %12, %11, %cst_8 {dimension_numbers = #tpu.dot_dimension_numbers<[1], [0], [0], [1], [0, 0, 1, 1], [], []>} : vector<16x128xbf16>, vector<128x128xbf16>, vector<16x128xf32> -> vector<16x128xf32>
    %cst_9 = arith.constant 0.000000e+00 : f32
    %14 = vector.broadcast %cst_9 : f32 to vector<16x128xf32>
    %15 = arith.maximumf %13, %14 : vector<16x128xf32>
    %16 = arith.truncf %7 : vector<16x128xf32> to vector<16x128xbf16>
    %17 = arith.truncf %1 : vector<16x128xf32> to vector<16x128xbf16>
    %18 = arith.truncf %8 : vector<16x128xf32> to vector<16x128xbf16>
    %19 = tpu.concatenate %16, %17, %18 in 0 : vector<16x128xbf16>, vector<16x128xbf16>, vector<16x128xbf16> -> vector<48x128xbf16>
    %c0_10 = arith.constant 0 : index
    %c0_11 = arith.constant 0 : index
    %20 = vector.load %arg4[%c0_10, %c0_11] : memref<128x256xbf16, #tpu.memory_space<vmem>>, vector<128x256xbf16>
    %cst_12 = arith.constant dense<0.000000e+00> : vector<48x256xf32>
    %21 = tpu.matmul %19, %20, %cst_12 {dimension_numbers = #tpu.dot_dimension_numbers<[1], [0], [0], [1], [0, 0, 1, 1], [], []>} : vector<48x128xbf16>, vector<128x256xbf16>, vector<48x256xf32> -> vector<48x256xf32>
    %cst_13 = arith.constant 0.000000e+00 : f32
    %22 = vector.broadcast %cst_13 : f32 to vector<48x256xf32>
    %23 = arith.maximumf %21, %22 : vector<48x256xf32>
    %24 = vector.extract_strided_slice %23 {offsets = [0, 0], sizes = [16, 128], strides = [1, 1]} : vector<48x256xf32> to vector<16x128xf32>
    %25 = vector.extract_strided_slice %23 {offsets = [16, 0], sizes = [16, 128], strides = [1, 1]} : vector<48x256xf32> to vector<16x128xf32>
    %26 = vector.extract_strided_slice %23 {offsets = [32, 128], sizes = [16, 128], strides = [1, 1]} : vector<48x256xf32> to vector<16x128xf32>
    %27 = arith.addf %24, %26 : vector<16x128xf32>
    %28 = arith.addf %27, %15 : vector<16x128xf32>
    %c0_14 = arith.constant 0 : index
    %c0_15 = arith.constant 0 : index
    %29 = vector.load %arg5[%c0_14, %c0_15] : memref<128x128xbf16, #tpu.memory_space<vmem>>, vector<128x128xbf16>
    %30 = arith.truncf %28 : vector<16x128xf32> to vector<16x128xbf16>
    %cst_16 = arith.constant dense<0.000000e+00> : vector<16x128xf32>
    %31 = tpu.matmul %30, %29, %cst_16 {dimension_numbers = #tpu.dot_dimension_numbers<[1], [0], [0], [1], [0, 0, 1, 1], [], []>} : vector<16x128xbf16>, vector<128x128xbf16>, vector<16x128xf32> -> vector<16x128xf32>
    %cst_17 = arith.constant 0.000000e+00 : f32
    %32 = vector.broadcast %cst_17 : f32 to vector<16x128xf32>
    %33 = arith.maximumf %31, %32 : vector<16x128xf32>
    %34 = arith.subf %24, %25 : vector<16x128xf32>
    %35 = arith.mulf %34, %34 : vector<16x128xf32>
    %36 = vector.shape_cast %35 : vector<16x128xf32> to vector<1x16x128xf32>
    %cst_18 = arith.constant dense<0.000000e+00> : vector<1xf32>
    %37 = vector.multi_reduction <add>, %36, %cst_18 [1, 2] : vector<1x16x128xf32> to vector<1xf32>
    %38 = vector.shape_cast %37 : vector<1xf32> to vector<1x1x1xf32>
    %39 = vector.extract %38[0, 0, 0] : f32 from vector<1x1x1xf32>
    %cst_19 = arith.constant 7.812500e-04 : f32
    %40 = arith.mulf %39, %cst_19 : f32
    %c0_20 = arith.constant 0 : index
    %41 = memref.load %arg9[%c0_20] : memref<1xf32, #tpu.memory_space<smem>>
    memref.store %40, %arg9[%c0_20] : memref<1xf32, #tpu.memory_space<smem>>
    %c0_21 = arith.constant 0 : index
    %c0_22 = arith.constant 0 : index
    %42 = vector.load %arg6[%c0_21, %c0_22] : memref<16x128xf32, #tpu.memory_space<vmem>>, vector<16x128xf32>
    tpu.vector_store %arg6[%c0_21, %c0_22], %24 {strides = array<i32>} : memref<16x128xf32, #tpu.memory_space<vmem>>, vector<16x128xf32>,
    %c0_23 = arith.constant 0 : index
    %c0_24 = arith.constant 0 : index
    %43 = vector.load %arg7[%c0_23, %c0_24] : memref<16x128xf32, #tpu.memory_space<vmem>>, vector<16x128xf32>
    tpu.vector_store %arg7[%c0_23, %c0_24], %26 {strides = array<i32>} : memref<16x128xf32, #tpu.memory_space<vmem>>, vector<16x128xf32>,
    %c0_25 = arith.constant 0 : index
    %c0_26 = arith.constant 0 : index
    %44 = vector.load %arg8[%c0_25, %c0_26] : memref<16x128xf32, #tpu.memory_space<vmem>>, vector<16x128xf32>
    tpu.vector_store %arg8[%c0_25, %c0_26], %33 {strides = array<i32>} : memref<16x128xf32, #tpu.memory_space<vmem>>, vector<16x128xf32>,
    return
  }
}

</mosaic_0001>

<llo_original>
// kernel: encoder_forward.1
$region0: #{encoder_forward.1}
  #allocation0 [shape = 'u32[]', space=smem, size = 0x4, offset = 0x4, fixed_abs, tag = 'smem constant byte address 0x4 - core index']
  #allocation1 [shape = 'u32[72,128]{1,0:T(1,128)}', space=vmem, size = 0x9000, scoped, tag = 'internal scratch']
  %s0 = inlined_call_operand.vmem [shape: f32[16,128], index: 0, kind: input, shape index: {}]
  %s1 = inlined_call_operand.vmem [shape: f32[16,128], index: 1, kind: input, shape index: {}]
  %s2 = inlined_call_operand.vmem [shape: bf16[128,256], index: 2, kind: input, shape index: {}]
  %s3 = inlined_call_operand.vmem [shape: bf16[128,128], index: 3, kind: input, shape index: {}]
  %s4 = inlined_call_operand.vmem [shape: bf16[128,256], index: 4, kind: input, shape index: {}]
  %s5 = inlined_call_operand.vmem [shape: bf16[128,128], index: 5, kind: input, shape index: {}]
  %s6 = inlined_call_operand.vmem [shape: f32[16,128], index: 6, kind: output, shape index: {0}]
  %s7 = inlined_call_operand.vmem [shape: f32[16,128], index: 7, kind: output, shape index: {1}]
  %s8 = inlined_call_operand.vmem [shape: f32[16,128], index: 8, kind: output, shape index: {2}]
  %s9 = inlined_call_operand.hbm [shape: f32[1], index: 9, kind: output, shape index: {3}]
  %10 = xla_tuple %s6, %s7, %s8, %s9
  %s11 = sld [smem:[#allocation0]]
  $region58: #{encoder_forward.1} parent=0
    _
  %s13 = ssub.s32 1, %s11
  %s14 = scalar_select 0, %s13, %s11
  $region1: #{encoder_forward.1} parent=0
    #allocation2 [shape = 'u8[512]{0}', space=smem, size = 0x200, scoped, tag = 'output window, operand 3, single buffered']
    #allocation3 [shape = 's32[1]{0}', space=sflag, size = 0x4, scoped, tag = 'scoped memory for encoder_forward.1']
    %15 = vsyncpa [#allocation3], 0
    // Predicated region
    $region2: #{encoder_forward.1} parent=1 // pred_check
      _
    $region3: #{encoder_forward.1} parent=1 // pred_check_branch
      %17 = sbr.rel (0) target = $region5
    $region4: #{encoder_forward.1} parent=1 // pred_region
      _
    $region5: #{encoder_forward.1} parent=1 // pred_fallthru
      _
    // Predicated region
    $region6: #{encoder_forward.1} parent=1 // pred_check
      _
    $region7: #{encoder_forward.1} parent=1 // pred_check_branch
      %19 = sbr.rel (0) target = $region9
    $region8: #{encoder_forward.1} parent=1 // pred_region
      _
    $region9: #{encoder_forward.1} parent=1 // pred_fallthru
      _
    // Predicated region
    $region10: #{encoder_forward.1} parent=1 // pred_check
      _
    $region11: #{encoder_forward.1} parent=1 // pred_check_branch
      %21 = sbr.rel (0) target = $region13
    $region12: #{encoder_forward.1} parent=1 // pred_region
      _
    $region13: #{encoder_forward.1} parent=1 // pred_fallthru
      _
    // Predicated region
    $region14: #{encoder_forward.1} parent=1 // pred_check
      _
    $region15: #{encoder_forward.1} parent=1 // pred_check_branch
      %23 = sbr.rel (0) target = $region17
    $region16: #{encoder_forward.1} parent=1 // pred_region
      _
    $region17: #{encoder_forward.1} parent=1 // pred_fallthru
      _
    // Predicated region
    $region18: #{encoder_forward.1} parent=1 // pred_check
      _
    $region19: #{encoder_forward.1} parent=1 // pred_check_branch
      %25 = sbr.rel (0) target = $region21
    $region20: #{encoder_forward.1} parent=1 // pred_region
      _
    $region21: #{encoder_forward.1} parent=1 // pred_fallthru
      _
    // Predicated region
    $region22: #{encoder_forward.1} parent=1 // pred_check
      _
    $region23: #{encoder_forward.1} parent=1 // pred_check_branch
      %27 = sbr.rel (0) target = $region25
    $region24: #{encoder_forward.1} parent=1 // pred_region
      _
    $region25: #{encoder_forward.1} parent=1 // pred_fallthru
      _
    %v28 = vld [vmem:[%s0] sm:$0xff]
    %v29 = vld [vmem:[%s0 + $0x8] sm:$0xff]
    %v30 = vld [vmem:[%s1] sm:$0xff]
    %v31 = vld [vmem:[%s1 + $0x8] sm:$0xff]
    %v32 = vld [vmem:[%s2] sm:$0xff]
    %v33 = vld [vmem:[%s2 + $0x8] sm:$0xff]
    %v34 = vld [vmem:[%s2 + $0x10] sm:$0xff]
    %v35 = vld [vmem:[%s2 + $0x18] sm:$0xff]
    %v36 = vld [vmem:[%s2 + $0x20] sm:$0xff]
    %v37 = vld [vmem:[%s2 + $0x28] sm:$0xff]
    %v38 = vld [vmem:[%s2 + $0x30] sm:$0xff]
    %v39 = vld [vmem:[%s2 + $0x38] sm:$0xff]
    %v40 = vld [vmem:[%s2 + $0x40] sm:$0xff]
    %v41 = vld [vmem:[%s2 + $0x48] sm:$0xff]
    %v42 = vld [vmem:[%s2 + $0x50] sm:$0xff]
    %v43 = vld [vmem:[%s2 + $0x58] sm:$0xff]
    %v44 = vld [vmem:[%s2 + $0x60] sm:$0xff]
    %v45 = vld [vmem:[%s2 + $0x68] sm:$0xff]
    %v46 = vld [vmem:[%s2 + $0x70] sm:$0xff]
    %v47 = vld [vmem:[%s2 + $0x78] sm:$0xff]
    %v48 = vpack.c.bf16 %v29, %v28
    %v65 = vunpack.c.l.b16 %v32
    %v66 = vunpack.c.h.b16 %v32
    %v67 = vunpack.c.l.b16 %v33
    %v68 = vunpack.c.h.b16 %v33
    %v69 = vunpack.c.l.b16 %v34
    %v70 = vunpack.c.h.b16 %v34
    %v71 = vunpack.c.l.b16 %v35
    %v72 = vunpack.c.h.b16 %v35
    %v73 = vunpack.c.l.b16 %v36
    %v74 = vunpack.c.h.b16 %v36
    %v75 = vunpack.c.l.b16 %v37
    %v76 = vunpack.c.h.b16 %v37
    %v77 = vunpack.c.l.b16 %v38
    %v78 = vunpack.c.h.b16 %v38
    %v79 = vunpack.c.l.b16 %v39
    %v80 = vunpack.c.h.b16 %v39
    %v81 = vunpack.c.l.b16 %v40
    %v82 = vunpack.c.h.b16 %v40
    %v83 = vunpack.c.l.b16 %v41
    %v84 = vunpack.c.h.b16 %v41
    %v85 = vunpack.c.l.b16 %v42
    %v86 = vunpack.c.h.b16 %v42
    %v87 = vunpack.c.l.b16 %v43
    %v88 = vunpack.c.h.b16 %v43
    %v89 = vunpack.c.l.b16 %v44
    %v90 = vunpack.c.h.b16 %v44
    %v91 = vunpack.c.l.b16 %v45
    %v92 = vunpack.c.h.b16 %v45
    %v93 = vunpack.c.l.b16 %v46
    %v94 = vunpack.c.h.b16 %v46
    %v95 = vunpack.c.l.b16 %v47
    %v96 = vunpack.c.h.b16 %v47
    %v97 = vpack.c.b16 %v67, %v65
    %v98 = vpack.c.b16 %v68, %v66
    %v99 = vpack.c.b16 %v71, %v69
    %v100 = vpack.c.b16 %v72, %v70
    %v101 = vpack.c.b16 %v75, %v73
    %v102 = vpack.c.b16 %v76, %v74
    %v103 = vpack.c.b16 %v79, %v77
    %v104 = vpack.c.b16 %v80, %v78
    %v105 = vpack.c.b16 %v83, %v81
    %v106 = vpack.c.b16 %v84, %v82
    %v107 = vpack.c.b16 %v87, %v85
    %v108 = vpack.c.b16 %v88, %v86
    %v109 = vpack.c.b16 %v91, %v89
    %v110 = vpack.c.b16 %v92, %v90
    %v111 = vpack.c.b16 %v95, %v93
    %v112 = vpack.c.b16 %v96, %v94
    %129 = vmatpush.bf16.msra.mxu0 %v111
    %130 = vmatpush.bf16.msra.mxu0 %v109
    %131 = vmatpush.bf16.msra.mxu0 %v107
    %132 = vmatpush.bf16.msra.mxu0 %v105
    %133 = vmatpush.bf16.msra.mxu0 %v103
    %134 = vmatpush.bf16.msra.mxu0 %v101
    %135 = vmatpush.bf16.msra.mxu0 %v99
    %136 = vmatpush.bf16.msra.mxu0 %v97
    %137 = vmatmul.bf16.gmra.mxu0 %v48
    %v138 = vpop.f32.mrf.mxu0
    %v139 = vadd.f32 0.0, %v138
    %v140 = vpop.f32.mrf.mxu0
    %v141 = vadd.f32 0.0, %v140
    %142 = vdwg.mxu0
    %143 = vmatpush.bf16.msra.mxu0 %v112
    %144 = vmatpush.bf16.msra.mxu0 %v110
    %145 = vmatpush.bf16.msra.mxu0 %v108
    %146 = vmatpush.bf16.msra.mxu0 %v106
    %147 = vmatpush.bf16.msra.mxu0 %v104
    %148 = vmatpush.bf16.msra.mxu0 %v102
    %149 = vmatpush.bf16.msra.mxu0 %v100
    %150 = vmatpush.bf16.msra.mxu0 %v98
    %151 = vmatmul.bf16.gmra.mxu0 %v48
    %v152 = vpop.f32.mrf.mxu0
    %v153 = vadd.f32 0.0, %v152
    %v154 = vpop.f32.mrf.mxu0
    %v155 = vadd.f32 0.0, %v154
    %156 = vdwg.mxu0
    %v157 = vmax.f32 %v139, 0.0
    %v158 = vmax.f32 %v153, 0.0
    %v159 = vmax.f32 %v141, 0.0
    %v160 = vmax.f32 %v155, 0.0
    %v161 = vadd.f32 %v157, %v158
    %v162 = vadd.f32 %v159, %v160
    %v163 = vadd.f32 %v161, %v28
    %v164 = vadd.f32 %v162, %v29
    %v165 = vld [vmem:[%s3] sm:$0xf]
    %v166 = vld [vmem:[%s3 + $0x4] sm:$0xf]
    %v167 = vld [vmem:[%s3 + $0x8] sm:$0xf]
    %v168 = vld [vmem:[%s3 + $0xc] sm:$0xf]
    %v169 = vld [vmem:[%s3 + $0x10] sm:$0xf]
    %v170 = vld [vmem:[%s3 + $0x14] sm:$0xf]
    %v171 = vld [vmem:[%s3 + $0x18] sm:$0xf]
    %v172 = vld [vmem:[%s3 + $0x1c] sm:$0xf]
    %v173 = vld [vmem:[%s3 + $0x20] sm:$0xf]
    %v174 = vld [vmem:[%s3 + $0x24] sm:$0xf]
    %v175 = vld [vmem:[%s3 + $0x28] sm:$0xf]
    %v176 = vld [vmem:[%s3 + $0x2c] sm:$0xf]
    %v177 = vld [vmem:[%s3 + $0x30] sm:$0xf]
    %v178 = vld [vmem:[%s3 + $0x34] sm:$0xf]
    %v179 = vld [vmem:[%s3 + $0x38] sm:$0xf]
    %v180 = vld [vmem:[%s3 + $0x3c] sm:$0xf]
    %v181 = vpack.c.bf16 %v164, %v163
    %v198 = vunpack.c.l.b16 %v165
    %v199 = vunpack.c.l.b16 %v166
    %v200 = vunpack.c.l.b16 %v167
    %v201 = vunpack.c.l.b16 %v168
    %v202 = vunpack.c.l.b16 %v169
    %v203 = vunpack.c.l.b16 %v170
    %v204 = vunpack.c.l.b16 %v171
    %v205 = vunpack.c.l.b16 %v172
    %v206 = vunpack.c.l.b16 %v173
    %v207 = vunpack.c.l.b16 %v174
    %v208 = vunpack.c.l.b16 %v175
    %v209 = vunpack.c.l.b16 %v176
    %v210 = vunpack.c.l.b16 %v177
    %v211 = vunpack.c.l.b16 %v178
    %v212 = vunpack.c.l.b16 %v179
    %v213 = vunpack.c.l.b16 %v180
    %v214 = vpack.c.b16 %v199, %v198
    %v215 = vpack.c.b16 %v201, %v200
    %v216 = vpack.c.b16 %v203, %v202
    %v217 = vpack.c.b16 %v205, %v204
    %v218 = vpack.c.b16 %v207, %v206
    %v219 = vpack.c.b16 %v209, %v208
    %v220 = vpack.c.b16 %v211, %v210
    %v221 = vpack.c.b16 %v213, %v212
    %230 = vmatpush.bf16.msra.mxu0 %v221
    %231 = vmatpush.bf16.msra.mxu0 %v220
    %232 = vmatpush.bf16.msra.mxu0 %v219
    %233 = vmatpush.bf16.msra.mxu0 %v218
    %234 = vmatpush.bf16.msra.mxu0 %v217
    %235 = vmatpush.bf16.msra.mxu0 %v216
    %236 = vmatpush.bf16.msra.mxu0 %v215
    %237 = vmatpush.bf16.msra.mxu0 %v214
    %238 = vmatmul.bf16.gmra.mxu0 %v181
    %v239 = vpop.f32.mrf.mxu0
    %v240 = vadd.f32 0.0, %v239
    %v241 = vpop.f32.mrf.mxu0
    %v242 = vadd.f32 0.0, %v241
    %243 = vdwg.mxu0
    %v244 = vmax.f32 %v240, 0.0
    %v245 = vmax.f32 %v242, 0.0
    %v246 = vpack.c.bf16 %v157, %v157
    %v247 = vpack.c.bf16 %v159, %v159
    %v248 = vpack.c.bf16 %v30, %v30
    %v249 = vpack.c.bf16 %v31, %v31
    %v250 = vpack.c.bf16 %v158, %v158
    %v251 = vpack.c.bf16 %v160, %v160
    %v254 = vunpack.c.l.b16 %v246
    %v255 = vunpack.c.l.b16 %v247
    %v256 = vpack.c.b16 %v255, %v254
    %v260 = vunpack.c.l.b16 %v248
    %v261 = vunpack.c.l.b16 %v249
    %v262 = vpack.c.b16 %v261, %v260
    %v266 = vunpack.c.l.b16 %v250
    %v267 = vunpack.c.l.b16 %v251
    %v268 = vpack.c.b16 %v267, %v266
    %v270 = vld [vmem:[%s4] sm:$0xff]
    %v271 = vld [vmem:[%s4 + $0x8] sm:$0xff]
    %v272 = vld [vmem:[%s4 + $0x10] sm:$0xff]
    %v273 = vld [vmem:[%s4 + $0x18] sm:$0xff]
    %v274 = vld [vmem:[%s4 + $0x20] sm:$0xff]
    %v275 = vld [vmem:[%s4 + $0x28] sm:$0xff]
    %v276 = vld [vmem:[%s4 + $0x30] sm:$0xff]
    %v277 = vld [vmem:[%s4 + $0x38] sm:$0xff]
    %v278 = vld [vmem:[%s4 + $0x40] sm:$0xff]
    %v279 = vld [vmem:[%s4 + $0x48] sm:$0xff]
    %v280 = vld [vmem:[%s4 + $0x50] sm:$0xff]
    %v281 = vld [vmem:[%s4 + $0x58] sm:$0xff]
    %v282 = vld [vmem:[%s4 + $0x60] sm:$0xff]
    %v283 = vld [vmem:[%s4 + $0x68] sm:$0xff]
    %v284 = vld [vmem:[%s4 + $0x70] sm:$0xff]
    %v285 = vld [vmem:[%s4 + $0x78] sm:$0xff]
    %v302 = vunpack.c.l.b16 %v270
    %v303 = vunpack.c.h.b16 %v270
    %v304 = vunpack.c.l.b16 %v271
    %v305 = vunpack.c.h.b16 %v271
    %v306 = vunpack.c.l.b16 %v272
    %v307 = vunpack.c.h.b16 %v272
    %v308 = vunpack.c.l.b16 %v273
    %v309 = vunpack.c.h.b16 %v273
    %v310 = vunpack.c.l.b16 %v274
    %v311 = vunpack.c.h.b16 %v274
    %v312 = vunpack.c.l.b16 %v275
    %v313 = vunpack.c.h.b16 %v275
    %v314 = vunpack.c.l.b16 %v276
    %v315 = vunpack.c.h.b16 %v276
    %v316 = vunpack.c.l.b16 %v277
    %v317 = vunpack.c.h.b16 %v277
    %v318 = vunpack.c.l.b16 %v278
    %v319 = vunpack.c.h.b16 %v278
    %v320 = vunpack.c.l.b16 %v279
    %v321 = vunpack.c.h.b16 %v279
    %v322 = vunpack.c.l.b16 %v280
    %v323 = vunpack.c.h.b16 %v280
    %v324 = vunpack.c.l.b16 %v281
    %v325 = vunpack.c.h.b16 %v281
    %v326 = vunpack.c.l.b16 %v282
    %v327 = vunpack.c.h.b16 %v282
    %v328 = vunpack.c.l.b16 %v283
    %v329 = vunpack.c.h.b16 %v283
    %v330 = vunpack.c.l.b16 %v284
    %v331 = vunpack.c.h.b16 %v284
    %v332 = vunpack.c.l.b16 %v285
    %v333 = vunpack.c.h.b16 %v285
    %v334 = vpack.c.b16 %v304, %v302
    %v335 = vpack.c.b16 %v305, %v303
    %v336 = vpack.c.b16 %v308, %v306
    %v337 = vpack.c.b16 %v309, %v307
    %v338 = vpack.c.b16 %v312, %v310
    %v339 = vpack.c.b16 %v313, %v311
    %v340 = vpack.c.b16 %v316, %v314
    %v341 = vpack.c.b16 %v317, %v315
    %v342 = vpack.c.b16 %v320, %v318
    %v343 = vpack.c.b16 %v321, %v319
    %v344 = vpack.c.b16 %v324, %v322
    %v345 = vpack.c.b16 %v325, %v323
    %v346 = vpack.c.b16 %v328, %v326
    %v347 = vpack.c.b16 %v329, %v327
    %v348 = vpack.c.b16 %v332, %v330
    %v349 = vpack.c.b16 %v333, %v331
    %366 = vmatpush.bf16.msra.mxu0 %v348
    %367 = vmatpush.bf16.msra.mxu0 %v346
    %368 = vmatpush.bf16.msra.mxu0 %v344
    %369 = vmatpush.bf16.msra.mxu0 %v342
    %370 = vmatpush.bf16.msra.mxu0 %v340
    %371 = vmatpush.bf16.msra.mxu0 %v338
    %372 = vmatpush.bf16.msra.mxu0 %v336
    %373 = vmatpush.bf16.msra.mxu0 %v334
    %374 = vmatmul.bf16.gmra.mxu0 %v256
    %v375 = vpop.f32.mrf.mxu0
    %v376 = vadd.f32 0.0, %v375
    %v377 = vpop.f32.mrf.mxu0
    %v378 = vadd.f32 0.0, %v377
    %379 = vmatmul.bf16.gmra.mxu0 %v262
    %v380 = vpop.f32.mrf.mxu0
    %v381 = vadd.f32 0.0, %v380
    %v382 = vpop.f32.mrf.mxu0
    %v383 = vadd.f32 0.0, %v382
    %384 = vmatmul.bf16.gmra.mxu0 %v268
    %v385 = vpop.f32.mrf.mxu0
    %v386 = vpop.f32.mrf.mxu0
    %387 = vdwg.mxu0
    %388 = vmatpush.bf16.msra.mxu0 %v349
    %389 = vmatpush.bf16.msra.mxu0 %v347
    %390 = vmatpush.bf16.msra.mxu0 %v345
    %391 = vmatpush.bf16.msra.mxu0 %v343
    %392 = vmatpush.bf16.msra.mxu0 %v341
    %393 = vmatpush.bf16.msra.mxu0 %v339
    %394 = vmatpush.bf16.msra.mxu0 %v337
    %395 = vmatpush.bf16.msra.mxu0 %v335
    %396 = vmatmul.bf16.gmra.mxu0 %v256
    %v397 = vpop.f32.mrf.mxu0
    %v398 = vpop.f32.mrf.mxu0
    %399 = vmatmul.bf16.gmra.mxu0 %v262
    %v400 = vpop.f32.mrf.mxu0
    %v401 = vpop.f32.mrf.mxu0
    %402 = vmatmul.bf16.gmra.mxu0 %v268
    %v403 = vpop.f32.mrf.mxu0
    %v404 = vadd.f32 0.0, %v403
    %v405 = vpop.f32.mrf.mxu0
    %v406 = vadd.f32 0.0, %v405
    %407 = vdwg.mxu0
    %v408 = vmax.f32 %v376, 0.0
    %v409 = vmax.f32 %v378, 0.0
    %v410 = vmax.f32 %v381, 0.0
    %v411 = vmax.f32 %v383, 0.0
    %v412 = vmax.f32 %v404, 0.0
    %v413 = vmax.f32 %v406, 0.0
    %v414 = vadd.f32 %v408, %v412
    %v415 = vadd.f32 %v409, %v413
    %v416 = vadd.f32 %v414, %v244
    %v417 = vadd.f32 %v415, %v245
    %v418 = vld [vmem:[%s5] sm:$0xf]
    %v419 = vld [vmem:[%s5 + $0x4] sm:$0xf]
    %v420 = vld [vmem:[%s5 + $0x8] sm:$0xf]
    %v421 = vld [vmem:[%s5 + $0xc] sm:$0xf]
    %v422 = vld [vmem:[%s5 + $0x10] sm:$0xf]
    %v423 = vld [vmem:[%s5 + $0x14] sm:$0xf]
    %v424 = vld [vmem:[%s5 + $0x18] sm:$0xf]
    %v425 = vld [vmem:[%s5 + $0x1c] sm:$0xf]
    %v426 = vld [vmem:[%s5 + $0x20] sm:$0xf]
    %v427 = vld [vmem:[%s5 + $0x24] sm:$0xf]
    %v428 = vld [vmem:[%s5 + $0x28] sm:$0xf]
    %v429 = vld [vmem:[%s5 + $0x2c] sm:$0xf]
    %v430 = vld [vmem:[%s5 + $0x30] sm:$0xf]
    %v431 = vld [vmem:[%s5 + $0x34] sm:$0xf]
    %v432 = vld [vmem:[%s5 + $0x38] sm:$0xf]
    %v433 = vld [vmem:[%s5 + $0x3c] sm:$0xf]
    %v434 = vpack.c.bf16 %v417, %v416
    %v451 = vunpack.c.l.b16 %v418
    %v452 = vunpack.c.l.b16 %v419
    %v453 = vunpack.c.l.b16 %v420
    %v454 = vunpack.c.l.b16 %v421
    %v455 = vunpack.c.l.b16 %v422
    %v456 = vunpack.c.l.b16 %v423
    %v457 = vunpack.c.l.b16 %v424
    %v458 = vunpack.c.l.b16 %v425
    %v459 = vunpack.c.l.b16 %v426
    %v460 = vunpack.c.l.b16 %v427
    %v461 = vunpack.c.l.b16 %v428
    %v462 = vunpack.c.l.b16 %v429
    %v463 = vunpack.c.l.b16 %v430
    %v464 = vunpack.c.l.b16 %v431
    %v465 = vunpack.c.l.b16 %v432
    %v466 = vunpack.c.l.b16 %v433
    %v467 = vpack.c.b16 %v452, %v451
    %v468 = vpack.c.b16 %v454, %v453
    %v469 = vpack.c.b16 %v456, %v455
    %v470 = vpack.c.b16 %v458, %v457
    %v471 = vpack.c.b16 %v460, %v459
    %v472 = vpack.c.b16 %v462, %v461
    %v473 = vpack.c.b16 %v464, %v463
    %v474 = vpack.c.b16 %v466, %v465
    %483 = vmatpush.bf16.msra.mxu0 %v474
    %484 = vmatpush.bf16.msra.mxu0 %v473
    %485 = vmatpush.bf16.msra.mxu0 %v472
    %486 = vmatpush.bf16.msra.mxu0 %v471
    %487 = vmatpush.bf16.msra.mxu0 %v470
    %488 = vmatpush.bf16.msra.mxu0 %v469
    %489 = vmatpush.bf16.msra.mxu0 %v468
    %490 = vmatpush.bf16.msra.mxu0 %v467
    %491 = vmatmul.bf16.gmra.mxu0 %v434
    %v492 = vpop.f32.mrf.mxu0
    %v493 = vadd.f32 0.0, %v492
    %v494 = vpop.f32.mrf.mxu0
    %v495 = vadd.f32 0.0, %v494
    %496 = vdwg.mxu0
    %v497 = vmax.f32 %v493, 0.0
    %v498 = vmax.f32 %v495, 0.0
    %v499 = vsub.f32 %v408, %v410
    %v500 = vsub.f32 %v409, %v411
    %v501 = vmul.f32 %v499, %v499
    %v502 = vmul.f32 %v500, %v500
    %v503 = vadd.f32 %v501, %v502
    %504 = vadd.xlane.f32.xlu0 %v503
    %v505 = vpop.xlane.xlu0 %504
    %v506 = vrot.slane %v505, 4
    %v507 = vadd.f32 %v505, %v506
    %v508 = vrot.slane %v507, 2
    %v509 = vadd.f32 %v507, %v508
    %v510 = vrot.slane %v509, 1
    %v511 = vadd.f32 %v509, %v510
    %s512 = vtos %v511
    %s513 = smul.f32 %s512, 0.00078125
    %s514 = scalar_lea.smem [#allocation2], 0
    %515 = sst [smem:[%s514]] %s513
    %516 = vst [vmem:[%s6] sm:$0xff] %v408
    %517 = vst [vmem:[%s6 + $0x8] sm:$0xff] %v409
    %518 = vst [vmem:[%s7] sm:$0xff] %v412
    %519 = vst [vmem:[%s7 + $0x8] sm:$0xff] %v413
    %520 = vst [vmem:[%s8] sm:$0xff] %v497
    %521 = vst [vmem:[%s8 + $0x8] sm:$0xff] %v498
    // Predicated region
    $region26: #{encoder_forward.1} parent=1 // pred_check
      _
    $region27: #{encoder_forward.1} parent=1 // pred_check_branch
      %523 = sbr.rel (0) target = $region29
    $region28: #{encoder_forward.1} parent=1 // pred_region
      _
    $region29: #{encoder_forward.1} parent=1 // pred_fallthru
      _
    // Predicated region
    $region30: #{encoder_forward.1} parent=1 // pred_check
      _
    $region31: #{encoder_forward.1} parent=1 // pred_check_branch
      %525 = sbr.rel (0) target = $region33
    $region32: #{encoder_forward.1} parent=1 // pred_region
      _
    $region33: #{encoder_forward.1} parent=1 // pred_fallthru
      _
    // Predicated region
    $region34: #{encoder_forward.1} parent=1 // pred_check
      _
    $region35: #{encoder_forward.1} parent=1 // pred_check_branch
      %527 = sbr.rel (0) target = $region37
    $region36: #{encoder_forward.1} parent=1 // pred_region
      _
    $region37: #{encoder_forward.1} parent=1 // pred_fallthru
      _
    // Predicated region
    $region38: #{encoder_forward.1} parent=1 // pred_check
      _
    $region39: #{encoder_forward.1} parent=1 // pred_check_branch
      %529 = sbr.rel (0) target = $region41
    $region40: #{encoder_forward.1} parent=1 // pred_region
      %531 = vsyncadd [#allocation3], 0
      %s533 = sshll.u32 %s9, 4
      %s534 = int_to_ptr.hbm [resolvable:$true] %s533
      %536 = dma.smem_to_hbm [#allocation2], 16, %s534, [#allocation3]
    $region41: #{encoder_forward.1} parent=1 // pred_fallthru
      _
    // Predicated region
    $region42: #{encoder_forward.1} parent=1 // pred_check
      _
    $region43: #{encoder_forward.1} parent=1 // pred_check_branch
      %538 = sbr.rel (0) target = $region45
    $region44: #{encoder_forward.1} parent=1 // pred_region
      _
    $region45: #{encoder_forward.1} parent=1 // pred_fallthru
      _
    // Predicated region
    $region46: #{encoder_forward.1} parent=1 // pred_check
      _
    $region47: #{encoder_forward.1} parent=1 // pred_check_branch
      %540 = sbr.rel (0) target = $region49
    $region48: #{encoder_forward.1} parent=1 // pred_region
      _
    $region49: #{encoder_forward.1} parent=1 // pred_fallthru
      _
    // Predicated region
    $region50: #{encoder_forward.1} parent=1 // pred_check
      _
    $region51: #{encoder_forward.1} parent=1 // pred_check_branch
      %542 = sbr.rel (0) target = $region53
    $region52: #{encoder_forward.1} parent=1 // pred_region
      _
    $region53: #{encoder_forward.1} parent=1 // pred_fallthru
      _
    // Predicated region
    $region54: #{encoder_forward.1} parent=1 // pred_check
      _
    $region55: #{encoder_forward.1} parent=1 // pred_check_branch
      %544 = sbr.rel (0) target = $region57
    $region56: #{encoder_forward.1} parent=1 // pred_region
      %546 = dma.done [#allocation3], 16
    $region57: #{encoder_forward.1} parent=1 // pred_fallthru
      _
    %547 = sfence
    %548 = vsyncpa [#allocation3], 1

</llo_original>
